<compile_context>
chip_gen: v7x
topology: tpu7x:2x2x1
jax: 0.10.0
libtpu: 0.0.40
codegen_flags: <defaults>
</compile_context>

<pallas_src>
import jax
import jax.numpy as jnp
from jax.experimental import pallas as pl
from jax.experimental.pallas import tpu as pltpu

HIDDEN_C = 10  # channels produced by conv1x1_10

_DEFAULT_BLOCK_BYTES = 8 * 1024 * 1024   # per-array per-block; 4x this when double-buffered
_SMALL_BYPASS_BYTES = 512 * 1024         # below this, plain XLA elementwise wins
_MIN_GRID_STEPS = 4                      # keep >=4 steps on >1 MiB inputs (v7x megacore / overlap)


def affine_kernel(ab_ref, x_ref, o_ref):
    """out = A*x + B  (A=ab[0], B=ab[1]); one fused multiply-add per tile."""
    x = x_ref[...].astype(jnp.float32)
    o_ref[...] = (x * ab_ref[0] + ab_ref[1]).astype(o_ref.dtype)


def _fold_params(w1, b1, w2, b2):
    """Fold the two 1x1x1 convolutions into a single affine map (A, B)."""
    w1f = w1.reshape(-1).astype(jnp.float32)
    b1f = b1.reshape(-1).astype(jnp.float32)
    w2f = w2.reshape(-1).astype(jnp.float32)
    a = jnp.sum(w1f * w2f)
    # NOTE: single output channel assumed (matches the module); accumulation
    # order differs from the unfused two-conv reference by ~float eps.
    b = jnp.sum(b1f * w2f) + b2.reshape(-1)[0].astype(jnp.float32)
    return a, b


def _affine_pallas_2d(x2d, ab, *, block_bytes):
    """Streaming A*x+B over a lane-dense (M, lane) array."""
    M, lane = x2d.shape
    itemsize = x2d.dtype.itemsize
    total_bytes = M * lane * itemsize

    # rows per block: multiple of 8, sized to ~block_bytes
    rows = max(8, (block_bytes // (lane * itemsize)) // 8 * 8)

    # Ensure >= _MIN_GRID_STEPS blocks on non-tiny inputs so v7x can shard the
    # parallel axis across both TensorCores and the pipeline actually overlaps.
    if total_bytes > (1 << 20) and M > 8:
        rows_for_steps = max(8, ((-(-M // _MIN_GRID_STEPS)) + 7) // 8 * 8)
        rows = min(rows, rows_for_steps)

    tile_m = min(rows, M)          # full-dim block allowed when M is small
    grid = pl.cdiv(M, tile_m)      # partial last block is fine (elementwise)

    # in + out, double-buffered, plus headroom for Pallas internal scratch.
    block_actual = tile_m * lane * itemsize
    vmem_limit = int(4 * block_actual + 16 * 1024 * 1024)   # <= 48 MiB at 8 MiB blocks

    cost = pl.CostEstimate(
        flops=2 * M * lane,
        transcendentals=0,
        bytes_accessed=2 * M * lane * itemsize,
    )

    smem = pl.BlockSpec(memory_space=pltpu.MemorySpace.SMEM)
    return pl.pallas_call(
        affine_kernel,
        out_shape=jax.ShapeDtypeStruct((M, lane), x2d.dtype),
        grid_spec=pltpu.PrefetchScalarGridSpec(
            num_scalar_prefetch=0,
            grid=(grid,),
            in_specs=[
                smem,                                           # (A, B) scalars
                pl.BlockSpec((tile_m, lane), lambda i: (i, 0)),
            ],
            out_specs=pl.BlockSpec((tile_m, lane), lambda i: (i, 0)),
        ),
        compiler_params=pltpu.CompilerParams(
            dimension_semantics=("parallel",),
            vmem_limit_bytes=vmem_limit,
        ),
        cost_estimate=cost,
    )(ab, x2d)


def contrast_conversion(x, w1, b1, w2, b2, *,
                        block_bytes=_DEFAULT_BLOCK_BYTES,
                        small_bypass_bytes=_SMALL_BYPASS_BYTES):
    """x: (N, 1, D, H, W). Applies Conv3d(1->10,k=1) then Conv3d(10->1,k=1)."""
    N, C, D, H, W = x.shape
    assert C == 1
    T = N * D * H * W
    itemsize = x.dtype.itemsize

    a, b = _fold_params(w1, b1, w2, b2)

    # Tiny inputs: fused XLA elementwise beats pallas_call dispatch overhead.
    if T * itemsize <= small_bypass_bytes:
        return (x.astype(jnp.float32) * a + b).astype(x.dtype)

    ab = jnp.stack([a, b])  # (2,) float32 -> SMEM

    # Lane-dense layout: pick the widest lane that divides T exactly (no tail).
    lane = None
    for cand in (2048, 1024, 512, 256, 128):
        if T % cand == 0:
            lane = cand
            break

    xf = x.reshape(-1)
    if lane is not None:
        out_flat = _affine_pallas_2d(
            xf.reshape(T // lane, lane), ab, block_bytes=block_bytes
        ).reshape(-1)
    else:
        # T not a multiple of 128: run the kernel on the aligned prefix and
        # compute the (< lane)-element tail in plain JAX; no jnp.pad round trip.
        lane = 2048
        t_main = (T // lane) * lane
        if t_main == 0:
            return (x.astype(jnp.float32) * a + b).astype(x.dtype)
        main = _affine_pallas_2d(
            xf[:t_main].reshape(t_main // lane, lane), ab, block_bytes=block_bytes
        ).reshape(-1)
        tail = (xf[t_main:].astype(jnp.float32) * a + b).astype(x.dtype)
        out_flat = jnp.concatenate([main, tail])

    return out_flat.reshape(N, 1, D, H, W)


def reference(x, w1, b1, w2, b2):
    """Pure-JAX reference matching PyTorch Conv3d(k=1) semantics (unfolded)."""
    h = x * w1.reshape(1, HIDDEN_C, 1, 1, 1) + b1.reshape(1, HIDDEN_C, 1, 1, 1)
    out = jnp.sum(h * w2.reshape(1, HIDDEN_C, 1, 1, 1), axis=1, keepdims=True)
    return out + b2.reshape(1, 1, 1, 1, 1)


if __name__ == "__main__":
    key = jax.random.PRNGKey(0)
    k_x, k_w1, k_b1, k_w2, k_b2 = jax.random.split(key, 5)

    # PyTorch parameter shapes flattened:
    #   conv1x1_10.weight: (10,1,1,1,1) -> (10,), bias: (10,)
    #   conv1x1.weight   : (1,10,1,1,1) -> (10,), bias: (1,)
    w1 = jax.random.normal(k_w1, (HIDDEN_C,), dtype=jnp.float32) * 0.5
    b1 = jax.random.normal(k_b1, (HIDDEN_C,), dtype=jnp.float32) * 0.1
    w2 = jax.random.normal(k_w2, (HIDDEN_C,), dtype=jnp.float32) * 0.5
    b2 = jax.random.normal(k_b2, (1,), dtype=jnp.float32) * 0.1

    def check(xin, **kw):
        out = jax.block_until_ready(contrast_conversion(xin, w1, b1, w2, b2, **kw))
        ref = reference(xin, w1, b1, w2, b2)
        assert out.shape == xin.shape
        assert jnp.allclose(out, ref, atol=1e-5, rtol=1e-5), "mismatch vs reference"

    # 1) Small NCDHW input -> small-input bypass path.
    x = jax.random.normal(k_x, (2, 1, 8, 16, 16), dtype=jnp.float32)
    check(x)

    # 2) Same input, force the Pallas kernel path (grid=1, full-dim block).
    check(x, small_bypass_bytes=0)

    # 3) Multi-step grid with a partial last block (grid > 1, M % tile_m != 0).
    x3 = jax.random.normal(k_x, (2, 1, 40, 16, 16), dtype=jnp.float32)
    check(x3, small_bypass_bytes=0, block_bytes=64 * 1024)

    # 4) Total size not a multiple of 128 -> aligned-prefix kernel + JAX tail.
    x4 = jax.random.normal(k_x, (1, 1, 3, 17, 45), dtype=jnp.float32)
    check(x4, small_bypass_bytes=0)

    # 5) ~1 MiB input with default sizing -> exercises the >=4-step grid cap.
    x5 = jax.random.normal(k_x, (2, 1, 33, 64, 64), dtype=jnp.float32)
    check(x5)

    print("KERNEL_OK")
</pallas_src>

<mosaic_0001>
module attributes {stable_mosaic.version = 11 : i64} {
  func.func @affine_kernel(%arg0: i32, %arg1: memref<2xf32, #tpu.memory_space<smem>>, %arg2: memref<2x2048xf32, #tpu.memory_space<vmem>>, %arg3: memref<2x2048xf32, #tpu.memory_space<vmem>>) attributes {dimension_semantics = [#tpu.dimension_semantics<parallel>], iteration_bounds = array<i64: 1>, scalar_prefetch = 0 : i64, scratch_operands = 0 : i64, tpu.core_type = #tpu.core_type<tc>, window_params = [{transform_indices = @transform_0, window_bounds = array<i64: 2>}, {transform_indices = @transform_1, window_bounds = array<i64: 2, 2048>}, {transform_indices = @transform_2, window_bounds = array<i64: 2, 2048>}]} {
    %c0 = arith.constant 0 : index
    %c0_0 = arith.constant 0 : index
    %0 = vector.load %arg2[%c0, %c0_0] : memref<2x2048xf32, #tpu.memory_space<vmem>>, vector<2x2048xf32>
    %c0_1 = arith.constant 0 : index
    %1 = memref.load %arg1[%c0_1] : memref<2xf32, #tpu.memory_space<smem>>
    %2 = vector.broadcast %1 : f32 to vector<2x2048xf32>
    %3 = arith.mulf %0, %2 : vector<2x2048xf32>
    %c1 = arith.constant 1 : index
    %4 = memref.load %arg1[%c1] : memref<2xf32, #tpu.memory_space<smem>>
    %5 = vector.broadcast %4 : f32 to vector<2x2048xf32>
    %6 = arith.addf %3, %5 : vector<2x2048xf32>
    %c0_2 = arith.constant 0 : index
    %c0_3 = arith.constant 0 : index
    %7 = vector.load %arg3[%c0_2, %c0_3] : memref<2x2048xf32, #tpu.memory_space<vmem>>, vector<2x2048xf32>
    tpu.vector_store %arg3[%c0_2, %c0_3], %6 {strides = array<i32>} : memref<2x2048xf32, #tpu.memory_space<vmem>>, vector<2x2048xf32>,
    return
  }
  func.func @transform_0(%arg0: i32) -> i32 {
    %c0_i32 = arith.constant 0 : i32
    %c0_i32_0 = arith.constant 0 : i32
    return %c0_i32 : i32
  }
  func.func @transform_1(%arg0: i32) -> (i32, i32) {
    %c0_i32 = arith.constant 0 : i32
    %c0_i32_0 = arith.constant 0 : i32
    return %arg0, %c0_i32 : i32, i32
  }
  func.func @transform_2(%arg0: i32) -> (i32, i32) {
    %c0_i32 = arith.constant 0 : i32
    %c0_i32_0 = arith.constant 0 : i32
    return %arg0, %c0_i32 : i32, i32
  }
}

</mosaic_0001>

<llo_original>
// kernel: tpu_custom_call.1
$region0: #{tpu_custom_call.1}
  #allocation0 [shape = 'u32[]', space=smem, size = 0x4, offset = 0x4, fixed_abs, tag = 'smem constant byte address 0x4 - core index']
  #allocation1 [shape = 'u32[144,128]{1,0:T(1,128)}', space=vmem, size = 0x12000, scoped, tag = 'internal scratch']
  %s0 = inlined_call_operand.hbm [shape: f32[2], index: 0, kind: input, shape index: {}]
  %s1 = inlined_call_operand.hbm [shape: f32[2,2048], index: 1, kind: input, shape index: {}]
  %s2 = inlined_call_operand.hbm [shape: f32[2,2048], index: 2, kind: output, shape index: {}]
  %s3 = sld [smem:[#allocation0]]
  $region26: #{tpu_custom_call.1} parent=0
    _
  %s5 = ssub.s32 1, %s3
  %s6 = scalar_select 0, %s5, %s3
  $region1: #{tpu_custom_call.1} parent=0
    #allocation2 [shape = 'u8[512]{0}', space=smem, size = 0x200, scoped, tag = 'input window, operand 0, single buffered']
    #allocation3 [shape = 's32[1]{0}', space=sflag, size = 0x4, scoped, tag = 'scoped memory for tpu_custom_call.1']
    #allocation4 [shape = 's32[1]{0}', space=sflag, size = 0x4, scoped, tag = 'scoped memory for tpu_custom_call.1']
    #allocation5 [shape = 's32[1]{0}', space=sflag, size = 0x4, scoped, tag = 'scoped memory for tpu_custom_call.1']
    #allocation6 [shape = 'u8[16384]{0}', space=vmem, size = 0x4000, scoped, tag = 'input window, operand 1, single buffered']
    #allocation7 [shape = 'u8[16384]{0}', space=vmem, size = 0x4000, scoped, tag = 'output window, operand 0, single buffered']
    %7 = vsyncpa [#allocation5], 0
    %8 = vsyncpa [#allocation3], 0
    %9 = vsyncpa [#allocation4], 0
    // Predicated region
    $region2: #{tpu_custom_call.1} parent=1 // pred_check
      _
    $region3: #{tpu_custom_call.1} parent=1 // pred_check_branch
      %11 = sbr.rel (0) target = $region5
    $region4: #{tpu_custom_call.1} parent=1 // pred_region
      %s13 = ssub.s32 16, 16
      %14 = vsyncadd [#allocation5], %s13
      %17 = dma.hbm_to_smem %s0, 16, [#allocation2], [#allocation5]
    $region5: #{tpu_custom_call.1} parent=1 // pred_fallthru
      _
    // Predicated region
    $region6: #{tpu_custom_call.1} parent=1 // pred_check
      _
    $region7: #{tpu_custom_call.1} parent=1 // pred_check_branch
      %19 = sbr.rel (0) target = $region9
    $region8: #{tpu_custom_call.1} parent=1 // pred_region
      %s21 = ssub.s32 512, 512
      %22 = vsyncadd [#allocation3], %s21
      %s24 = sshll.u32 [#allocation6], 4
      %s25 = int_to_ptr.vmem [resolvable:$true] %s24
      %27 = dma.hbm_to_vmem [thread:$0]  %s1, 512, %s25, [#allocation3]
    $region9: #{tpu_custom_call.1} parent=1 // pred_fallthru
      _
    // Predicated region
    $region10: #{tpu_custom_call.1} parent=1 // pred_check
      _
    $region11: #{tpu_custom_call.1} parent=1 // pred_check_branch
      %29 = sbr.rel (0) target = $region13
    $region12: #{tpu_custom_call.1} parent=1 // pred_region
      %30 = dma.done [#allocation5], 16
    $region13: #{tpu_custom_call.1} parent=1 // pred_fallthru
      _
    // Predicated region
    $region14: #{tpu_custom_call.1} parent=1 // pred_check
      _
    $region15: #{tpu_custom_call.1} parent=1 // pred_check_branch
      %32 = sbr.rel (0) target = $region17
    $region16: #{tpu_custom_call.1} parent=1 // pred_region
      %33 = dma.done [#allocation3], 512
    $region17: #{tpu_custom_call.1} parent=1 // pred_fallthru
      _
    %34 = sfence
    %v35 = vld [vmem:[#allocation6] sm:$0xff]
    %v36 = vld [vmem:[#allocation6 + $0x8] sm:$0xff]
    %v37 = vld [vmem:[#allocation6 + $0x10] sm:$0xff]
    %v38 = vld [vmem:[#allocation6 + $0x18] sm:$0xff]
    %s39 = sld [smem:[#allocation2]]
    %v40 = vstv %s39
    %v41 = vmul.f32 %v35, %v40
    %v42 = vmul.f32 %v36, %v40
    %v43 = vmul.f32 %v37, %v40
    %v44 = vmul.f32 %v38, %v40
    %s45 = sld [smem:[#allocation2 + $0x1]]
    %v46 = vstv %s45
    %v47 = vadd.f32 %v41, %v46
    %v48 = vadd.f32 %v42, %v46
    %v49 = vadd.f32 %v43, %v46
    %v50 = vadd.f32 %v44, %v46
    %51 = vst [vmem:[#allocation7] sm:$0xff] %v47
    %52 = vst [vmem:[#allocation7 + $0x8] sm:$0xff] %v48
    %53 = vst [vmem:[#allocation7 + $0x10] sm:$0xff] %v49
    %54 = vst [vmem:[#allocation7 + $0x18] sm:$0xff] %v50
    // Predicated region
    $region18: #{tpu_custom_call.1} parent=1 // pred_check
      _
    $region19: #{tpu_custom_call.1} parent=1 // pred_check_branch
      %56 = sbr.rel (0) target = $region21
    $region20: #{tpu_custom_call.1} parent=1 // pred_region
      %s58 = ssub.s32 512, 512
      %59 = vsyncadd [#allocation4], %s58
      %s61 = sshll.u32 [#allocation7], 4
      %s62 = int_to_ptr.vmem [resolvable:$true] %s61
      %64 = dma.vmem_to_hbm [thread:$0]  %s62, 512, %s2, [#allocation4]
    $region21: #{tpu_custom_call.1} parent=1 // pred_fallthru
      _
    // Predicated region
    $region22: #{tpu_custom_call.1} parent=1 // pred_check
      _
    $region23: #{tpu_custom_call.1} parent=1 // pred_check_branch
      %66 = sbr.rel (0) target = $region25
    $region24: #{tpu_custom_call.1} parent=1 // pred_region
      %67 = dma.done [#allocation4], 512
    $region25: #{tpu_custom_call.1} parent=1 // pred_fallthru
      _
    %68 = vsyncpa [#allocation3], 1
    %69 = vsyncpa [#allocation4], 1
    %70 = vsyncpa [#allocation5], 1

</llo_original>
